<compile_context>
chip_gen: v6e
topology: v6e:2x2x1
jax: 0.10.0
libtpu: 0.0.40
codegen_flags: <defaults>
</compile_context>

<pallas_src>
import jax
import jax.numpy as jnp
from jax.experimental import pallas as pl
from jax.experimental.pallas import tpu as pltpu


def _round_up(x, m):
    return ((x + m - 1) // m) * m


def _cdiv(a, b):
    return (a + b - 1) // b


def _pad2d(a, rows, cols):
    pr, pc = rows - a.shape[0], cols - a.shape[1]
    if pr == 0 and pc == 0:
        return a
    return jnp.pad(a, ((0, pr), (0, pc)))


def _ffn_kernel_fused(x_ref, w1_ref, b1_ref, w2_ref, b2_ref, o_ref):
    """Whole hidden dim in one block: no scratch, no reduction epilogue."""
    h = jnp.dot(x_ref[...], w1_ref[...], preferred_element_type=jnp.float32)
    h = jnp.maximum(h + b1_ref[...].astype(jnp.float32), 0.0)     # bias + ReLU (VPU)
    o = jnp.dot(h.astype(w2_ref.dtype), w2_ref[...],
                preferred_element_type=jnp.float32)
    o_ref[...] = (o + b2_ref[...].astype(jnp.float32)).astype(o_ref.dtype)


def _ffn_kernel_reduce(x_ref, w1_ref, b1_ref, w2_ref, b2_ref, o_ref, acc_ref):
    """Hidden dim tiled: accumulate fc2 partial products across grid axis 1."""
    k = pl.program_id(1)

    @pl.when(k == 0)
    def _():
        acc_ref[...] = jnp.zeros_like(acc_ref)

    # fc1 block: (tm, E) @ (E, th) on the MXU, f32 accumulation.
    h = jnp.dot(x_ref[...], w1_ref[...], preferred_element_type=jnp.float32)
    h = jnp.maximum(h + b1_ref[...].astype(jnp.float32), 0.0)

    # fc2 block: (tm, th) @ (th, E), accumulate over the hidden reduction.
    acc_ref[...] += jnp.dot(h.astype(w2_ref.dtype), w2_ref[...],
                            preferred_element_type=jnp.float32)

    # Epilogue once, on the final hidden block: add b2, cast, store.
    @pl.when(k == pl.num_programs(1) - 1)
    def _():
        o_ref[...] = (acc_ref[...] + b2_ref[...].astype(jnp.float32)).astype(
            o_ref.dtype
        )


def feed_forward(x, w1, b1, w2, b2, *, tm_max=512, th_max=512):
    """x: (..., embed_size). Returns (..., embed_size).

    w1: (embed, hidden) = fc1.weight.T; b1: (1, hidden) or (hidden,)
    w2: (hidden, embed) = fc2.weight.T; b2: (1, embed) or (embed,)
    """
    embed = x.shape[-1]
    hidden = w1.shape[1]
    assert w1.shape == (embed, hidden)
    assert w2.shape == (hidden, embed)
    assert b1.size == hidden and b2.size == embed

    orig_shape = x.shape
    x2d = x.reshape(-1, embed)                       # (N, E)
    n = x2d.shape[0]

    e_pad = _round_up(embed, 128)                    # lane-dense output width
    h128 = _round_up(hidden, 128)

    # --- tile selection: start big, shrink until conservative VMEM estimate fits.
    tm = min(tm_max, _round_up(n, 8))                # row tile (sublane multiple of 8)
    th = min(th_max, h128)                           # hidden tile (lane multiple of 128)

    def vmem_est(tm_, th_):
        # double-buffered x/out, f32 acc scratch, double-buffered w1/w2 blocks.
        return 4 * (5 * tm_ * e_pad + 4 * e_pad * th_ + 2 * (th_ + e_pad))

    budget = 48 * 1024 * 1024
    while vmem_est(tm, th) > budget and (tm > 8 or th > 128):
        if tm > 8 and tm >= th:
            tm = max(8, tm // 2)
        elif th > 128:
            th = max(128, th // 2)
        else:
            break

    n_pad = _round_up(n, tm)
    single = hidden <= th
    if single:
        th = h128
        h_pad = h128
    else:
        # Balance hidden blocks to minimize padding (vs. naive round_up(h, th)).
        nk = _cdiv(h128, th)
        th = _round_up(_cdiv(h128, nk), 128)
        h_pad = nk * th

    # Zero-padding is exact for matmul/bias/ReLU; padded rows/cols sliced off below.
    x_p = _pad2d(x2d, n_pad, e_pad)
    w1_p = _pad2d(w1, e_pad, h_pad)
    b1_p = _pad2d(b1.reshape(1, hidden), 1, h_pad)
    w2_p = _pad2d(w2, h_pad, e_pad)
    b2_p = _pad2d(b2.reshape(1, embed), 1, e_pad)

    flops = 4 * n_pad * e_pad * h_pad                # two matmuls, 2*M*K*N each
    bytes_accessed = sum(a.size * a.dtype.itemsize
                         for a in (x_p, w1_p, b1_p, w2_p, b2_p))
    bytes_accessed += n_pad * e_pad * x.dtype.itemsize
    cost = pl.CostEstimate(flops=flops, transcendentals=0,
                           bytes_accessed=bytes_accessed)

    if single:
        kernel = _ffn_kernel_fused
        dims = ("parallel",)
        grid_spec = pltpu.PrefetchScalarGridSpec(
            num_scalar_prefetch=0,
            grid=(n_pad // tm,),
            in_specs=[
                pl.BlockSpec((tm, e_pad), lambda i: (i, 0)),      # x row tile
                pl.BlockSpec((e_pad, th), lambda i: (0, 0)),      # w1 (resident)
                pl.BlockSpec((1, th), lambda i: (0, 0)),          # b1 (resident)
                pl.BlockSpec((th, e_pad), lambda i: (0, 0)),      # w2 (resident)
                pl.BlockSpec((1, e_pad), lambda i: (0, 0)),       # b2 (resident)
            ],
            out_specs=pl.BlockSpec((tm, e_pad), lambda i: (i, 0)),
        )
    else:
        kernel = _ffn_kernel_reduce
        dims = ("parallel", "arbitrary")
        grid_spec = pltpu.PrefetchScalarGridSpec(
            num_scalar_prefetch=0,
            grid=(n_pad // tm, h_pad // th),
            in_specs=[
                pl.BlockSpec((tm, e_pad), lambda i, k: (i, 0)),   # x row tile
                pl.BlockSpec((e_pad, th), lambda i, k: (0, k)),   # w1 hidden block
                pl.BlockSpec((1, th), lambda i, k: (0, k)),       # b1 hidden block
                pl.BlockSpec((th, e_pad), lambda i, k: (k, 0)),   # w2 hidden block
                pl.BlockSpec((1, e_pad), lambda i, k: (0, 0)),    # b2 (resident)
            ],
            out_specs=pl.BlockSpec((tm, e_pad), lambda i, k: (i, 0)),
            scratch_shapes=[pltpu.VMEM((tm, e_pad), jnp.float32)],
        )

    out_p = pl.pallas_call(
        kernel,
        out_shape=jax.ShapeDtypeStruct((n_pad, e_pad), x.dtype),
        grid_spec=grid_spec,
        compiler_params=pltpu.CompilerParams(
            dimension_semantics=dims,
            vmem_limit_bytes=64 * 1024 * 1024,       # fits v7x's 64 MiB physical VMEM
        ),
        cost_estimate=cost,
    )(x_p, w1_p, b1_p, w2_p, b2_p)

    return out_p[:n, :embed].reshape(orig_shape)


def init_params(key, embed_size, hidden_size, dtype=jnp.float32):
    """Deterministic init mimicking PyTorch nn.Linear (uniform +-1/sqrt(fan_in))."""
    k1, k2, k3, k4 = jax.random.split(key, 4)
    bound1 = 1.0 / (embed_size ** 0.5)
    bound2 = 1.0 / (hidden_size ** 0.5)
    # stored transposed vs. PyTorch: w1 = fc1.weight.T, w2 = fc2.weight.T
    w1 = jax.random.uniform(k1, (embed_size, hidden_size), dtype, -bound1, bound1)
    b1 = jax.random.uniform(k2, (1, hidden_size), dtype, -bound1, bound1)
    w2 = jax.random.uniform(k3, (hidden_size, embed_size), dtype, -bound2, bound2)
    b2 = jax.random.uniform(k4, (1, embed_size), dtype, -bound2, bound2)
    return w1, b1, w2, b2


if __name__ == "__main__":
    key = jax.random.PRNGKey(0)

    # --- small shapes consistent with the module (fused single-block path) ---
    batch, seq, embed_size, hidden_size = 2, 8, 32, 64
    kx, kp, kx2, kp2 = jax.random.split(key, 4)
    x = jax.random.normal(kx, (batch, seq, embed_size), dtype=jnp.float32)
    w1, b1, w2, b2 = init_params(kp, embed_size, hidden_size)

    out = jax.block_until_ready(feed_forward(x, w1, b1, w2, b2))
    ref = jnp.maximum(x @ w1 + b1[0], 0.0) @ w2 + b2[0]
    assert out.shape == (batch, seq, embed_size)
    assert jnp.allclose(out, ref, atol=1e-5, rtol=1e-5)

    # --- exercise the hidden-reduction (multi-block) path at small shapes ---
    embed2, hidden2 = 48, 256
    x2 = jax.random.normal(kx2, (batch, seq, embed2), dtype=jnp.float32)
    w1b, b1b, w2b, b2b = init_params(kp2, embed2, hidden2)
    out2 = jax.block_until_ready(
        feed_forward(x2, w1b, b1b, w2b, b2b, th_max=128)
    )
    ref2 = jnp.maximum(x2 @ w1b + b1b[0], 0.0) @ w2b + b2b[0]
    assert out2.shape == (batch, seq, embed2)
    assert jnp.allclose(out2, ref2, atol=1e-5, rtol=1e-5)

    print("KERNEL_OK")
</pallas_src>

<mosaic_0001>
module attributes {stable_mosaic.version = 11 : i64} {
  func.func @_ffn_kernel_fused(%arg0: i32, %arg1: memref<16x128xf32, #tpu.memory_space<vmem>>, %arg2: memref<128x128xf32, #tpu.memory_space<vmem>>, %arg3: memref<1x128xf32, #tpu.memory_space<vmem>>, %arg4: memref<128x128xf32, #tpu.memory_space<vmem>>, %arg5: memref<1x128xf32, #tpu.memory_space<vmem>>, %arg6: memref<16x128xf32, #tpu.memory_space<vmem>>) attributes {dimension_semantics = [#tpu.dimension_semantics<parallel>], iteration_bounds = array<i64: 1>, scalar_prefetch = 0 : i64, scratch_operands = 0 : i64, tpu.core_type = #tpu.core_type<tc>, window_params = [{transform_indices = @transform_0, window_bounds = array<i64: 16, 128>}, {pipeline_mode = #tpu.pipeline_mode<synchronous>, transform_indices = @transform_1, window_bounds = array<i64: 128, 128>}, {pipeline_mode = #tpu.pipeline_mode<synchronous>, transform_indices = @transform_2, window_bounds = array<i64: 1, 128>}, {pipeline_mode = #tpu.pipeline_mode<synchronous>, transform_indices = @transform_3, window_bounds = array<i64: 128, 128>}, {pipeline_mode = #tpu.pipeline_mode<synchronous>, transform_indices = @transform_4, window_bounds = array<i64: 1, 128>}, {transform_indices = @transform_5, window_bounds = array<i64: 16, 128>}]} {
    %c0 = arith.constant 0 : index
    %c0_0 = arith.constant 0 : index
    %0 = vector.load %arg1[%c0, %c0_0] : memref<16x128xf32, #tpu.memory_space<vmem>>, vector<16x128xf32>
    %c0_1 = arith.constant 0 : index
    %c0_2 = arith.constant 0 : index
    %1 = vector.load %arg2[%c0_1, %c0_2] : memref<128x128xf32, #tpu.memory_space<vmem>>, vector<128x128xf32>
    %cst = arith.constant dense<0.000000e+00> : vector<16x128xf32>
    %2 = tpu.matmul %0, %1, %cst {dimension_numbers = #tpu.dot_dimension_numbers<[1], [0], [0], [1], [0, 0, 1, 1], [], []>} : vector<16x128xf32>, vector<128x128xf32>, vector<16x128xf32> -> vector<16x128xf32>
    %c0_3 = arith.constant 0 : index
    %c0_4 = arith.constant 0 : index
    %3 = vector.load %arg3[%c0_3, %c0_4] : memref<1x128xf32, #tpu.memory_space<vmem>>, vector<1x128xf32>
    %4 = vector.broadcast %3 : vector<1x128xf32> to vector<16x128xf32>
    %5 = arith.addf %2, %4 : vector<16x128xf32>
    %cst_5 = arith.constant 0.000000e+00 : f32
    %6 = vector.broadcast %cst_5 : f32 to vector<16x128xf32>
    %7 = arith.maximumf %5, %6 : vector<16x128xf32>
    %c0_6 = arith.constant 0 : index
    %c0_7 = arith.constant 0 : index
    %8 = vector.load %arg4[%c0_6, %c0_7] : memref<128x128xf32, #tpu.memory_space<vmem>>, vector<128x128xf32>
    %cst_8 = arith.constant dense<0.000000e+00> : vector<16x128xf32>
    %9 = tpu.matmul %7, %8, %cst_8 {dimension_numbers = #tpu.dot_dimension_numbers<[1], [0], [0], [1], [0, 0, 1, 1], [], []>} : vector<16x128xf32>, vector<128x128xf32>, vector<16x128xf32> -> vector<16x128xf32>
    %c0_9 = arith.constant 0 : index
    %c0_10 = arith.constant 0 : index
    %10 = vector.load %arg5[%c0_9, %c0_10] : memref<1x128xf32, #tpu.memory_space<vmem>>, vector<1x128xf32>
    %11 = vector.broadcast %10 : vector<1x128xf32> to vector<16x128xf32>
    %12 = arith.addf %9, %11 : vector<16x128xf32>
    %c0_11 = arith.constant 0 : index
    %c0_12 = arith.constant 0 : index
    %13 = vector.load %arg6[%c0_11, %c0_12] : memref<16x128xf32, #tpu.memory_space<vmem>>, vector<16x128xf32>
    tpu.vector_store %arg6[%c0_11, %c0_12], %12 {strides = array<i32>} : memref<16x128xf32, #tpu.memory_space<vmem>>, vector<16x128xf32>,
    return
  }
  func.func @transform_0(%arg0: i32) -> (i32, i32) {
    %c0_i32 = arith.constant 0 : i32
    %c0_i32_0 = arith.constant 0 : i32
    return %arg0, %c0_i32 : i32, i32
  }
  func.func @transform_1(%arg0: i32) -> (i32, i32) {
    %c0_i32 = arith.constant 0 : i32
    %c0_i32_0 = arith.constant 0 : i32
    %c0_i32_1 = arith.constant 0 : i32
    return %c0_i32, %c0_i32_0 : i32, i32
  }
  func.func @transform_2(%arg0: i32) -> (i32, i32) {
    %c0_i32 = arith.constant 0 : i32
    %c0_i32_0 = arith.constant 0 : i32
    %c0_i32_1 = arith.constant 0 : i32
    return %c0_i32, %c0_i32_0 : i32, i32
  }
  func.func @transform_3(%arg0: i32) -> (i32, i32) {
    %c0_i32 = arith.constant 0 : i32
    %c0_i32_0 = arith.constant 0 : i32
    %c0_i32_1 = arith.constant 0 : i32
    return %c0_i32, %c0_i32_0 : i32, i32
  }
  func.func @transform_4(%arg0: i32) -> (i32, i32) {
    %c0_i32 = arith.constant 0 : i32
    %c0_i32_0 = arith.constant 0 : i32
    %c0_i32_1 = arith.constant 0 : i32
    return %c0_i32, %c0_i32_0 : i32, i32
  }
  func.func @transform_5(%arg0: i32) -> (i32, i32) {
    %c0_i32 = arith.constant 0 : i32
    %c0_i32_0 = arith.constant 0 : i32
    return %arg0, %c0_i32 : i32, i32
  }
}

</mosaic_0001>

<llo_original>
// kernel: tpu_custom_call.1
$region0: #{tpu_custom_call.1}
  #allocation0 [shape = 'u32[]', space=smem, size = 0x4, offset = 0x4, fixed_abs, tag = 'smem constant byte address 0x4 - core index']
  #allocation1 [shape = 'u32[144,128]{1,0:T(1,128)}', space=vmem, size = 0x12000, scoped, tag = 'internal scratch']
  %s0 = inlined_call_operand.hbm [shape: f32[16,128], index: 0, kind: input, shape index: {}]
  %s1 = inlined_call_operand.hbm [shape: f32[128,128], index: 1, kind: input, shape index: {}]
  %s2 = inlined_call_operand.vmem [shape: f32[1,128], index: 2, kind: input, shape index: {}]
  %s3 = inlined_call_operand.hbm [shape: f32[128,128], index: 3, kind: input, shape index: {}]
  %s4 = inlined_call_operand.vmem [shape: f32[1,128], index: 4, kind: input, shape index: {}]
  %s5 = inlined_call_operand.hbm [shape: f32[16,128], index: 5, kind: output, shape index: {}]
  %s6 = sld [smem:[#allocation0]]
  $region42: #{tpu_custom_call.1} parent=0
    _
  %s8 = ssub.s32 1, %s6
  %s9 = scalar_select 0, %s8, %s6
  $region1: #{tpu_custom_call.1} parent=0
    #allocation2 [shape = 'u8[8192]{0}', space=vmem, size = 0x2000, scoped, tag = 'input window, operand 0, single buffered']
    #allocation3 [shape = 's32[1]{0}', space=sflag, size = 0x4, scoped, tag = 'scoped memory for tpu_custom_call.1']
    #allocation4 [shape = 's32[1]{0}', space=sflag, size = 0x4, scoped, tag = 'scoped memory for tpu_custom_call.1']
    #allocation5 [shape = 'u8[65536]{0}', space=vmem, size = 0x10000, scoped, tag = 'input window, operand 1, single buffered']
    #allocation6 [shape = 's32[1]{0}', space=sflag, size = 0x4, scoped, tag = 'scoped memory for tpu_custom_call.1']
    #allocation7 [shape = 'u8[65536]{0}', space=vmem, size = 0x10000, scoped, tag = 'input window, operand 3, single buffered']
    #allocation8 [shape = 'u8[8192]{0}', space=vmem, size = 0x2000, scoped, tag = 'output window, operand 0, single buffered']
    %10 = vsyncpa [#allocation3], 0
    %11 = vsyncpa [#allocation6], 0
    %12 = vsyncpa [#allocation4], 0
    // Predicated region
    $region2: #{tpu_custom_call.1} parent=1 // pred_check
      _
    $region3: #{tpu_custom_call.1} parent=1 // pred_check_branch
      %14 = sbr.rel (0) target = $region5
    $region4: #{tpu_custom_call.1} parent=1 // pred_region
      %s16 = ssub.s32 256, 256
      %17 = vsyncadd [#allocation3], %s16
      %s18 = sshll.u32 [#allocation2], 4
      %s19 = int_to_ptr.vmem [resolvable:$true] %s18
      %24 = dma.hbm_to_vmem [thread:$0]  %s0, 256, %s19, [#allocation3], 128, 128, 8
    $region5: #{tpu_custom_call.1} parent=1 // pred_fallthru
      _
    // Predicated region
    $region6: #{tpu_custom_call.1} parent=1 // pred_check
      _
    $region7: #{tpu_custom_call.1} parent=1 // pred_check_branch
      %26 = sbr.rel (0) target = $region9
    $region8: #{tpu_custom_call.1} parent=1 // pred_region
      %s28 = ssub.s32 2048, 2048
      %29 = vsyncadd [#allocation6], %s28
      %s30 = sshll.u32 [#allocation5], 4
      %s31 = int_to_ptr.vmem [resolvable:$true] %s30
      %36 = dma.hbm_to_vmem [thread:$0]  %s1, 2048, %s31, [#allocation6], 128, 128, 8
    $region9: #{tpu_custom_call.1} parent=1 // pred_fallthru
      _
    // Predicated region
    $region10: #{tpu_custom_call.1} parent=1 // pred_check
      _
    $region11: #{tpu_custom_call.1} parent=1 // pred_check_branch
      %38 = sbr.rel (0) target = $region13
    $region12: #{tpu_custom_call.1} parent=1 // pred_region
      _
    $region13: #{tpu_custom_call.1} parent=1 // pred_fallthru
      _
    // Predicated region
    $region14: #{tpu_custom_call.1} parent=1 // pred_check
      _
    $region15: #{tpu_custom_call.1} parent=1 // pred_check_branch
      %40 = sbr.rel (0) target = $region17
    $region16: #{tpu_custom_call.1} parent=1 // pred_region
      %s42 = ssub.s32 2048, 2048
      %43 = vsyncadd [#allocation6], %s42
      %s44 = sshll.u32 [#allocation7], 4
      %s45 = int_to_ptr.vmem [resolvable:$true] %s44
      %50 = dma.hbm_to_vmem [thread:$0]  %s3, 2048, %s45, [#allocation6], 128, 128, 8
    $region17: #{tpu_custom_call.1} parent=1 // pred_fallthru
      _
    // Predicated region
    $region18: #{tpu_custom_call.1} parent=1 // pred_check
      _
    $region19: #{tpu_custom_call.1} parent=1 // pred_check_branch
      %52 = sbr.rel (0) target = $region21
    $region20: #{tpu_custom_call.1} parent=1 // pred_region
      _
    $region21: #{tpu_custom_call.1} parent=1 // pred_fallthru
      _
    // Predicated region
    $region22: #{tpu_custom_call.1} parent=1 // pred_check
      _
    $region23: #{tpu_custom_call.1} parent=1 // pred_check_branch
      %54 = sbr.rel (0) target = $region25
    $region24: #{tpu_custom_call.1} parent=1 // pred_region
      %55 = dma.done [#allocation3], 256
    $region25: #{tpu_custom_call.1} parent=1 // pred_fallthru
      _
    // Predicated region
    $region26: #{tpu_custom_call.1} parent=1 // pred_check
      _
    $region27: #{tpu_custom_call.1} parent=1 // pred_check_branch
      %57 = sbr.rel (0) target = $region29
    $region28: #{tpu_custom_call.1} parent=1 // pred_region
      %58 = dma.done [#allocation6], 2048
    $region29: #{tpu_custom_call.1} parent=1 // pred_fallthru
      _
    // Predicated region
    $region30: #{tpu_custom_call.1} parent=1 // pred_check
      _
    $region31: #{tpu_custom_call.1} parent=1 // pred_check_branch
      %60 = sbr.rel (0) target = $region33
    $region32: #{tpu_custom_call.1} parent=1 // pred_region
      %61 = dma.done [#allocation6], 2048
    $region33: #{tpu_custom_call.1} parent=1 // pred_fallthru
      _
    %v62 = vld [vmem:[#allocation2] sm:$0xff]
    %v63 = vld [vmem:[#allocation2 + $0x8] sm:$0xff]
    %v64 = vld [vmem:[#allocation5] sm:$0xff]
    %v65 = vld [vmem:[#allocation5 + $0x8] sm:$0xff]
    %v66 = vld [vmem:[#allocation5 + $0x10] sm:$0xff]
    %v67 = vld [vmem:[#allocation5 + $0x18] sm:$0xff]
    %v68 = vld [vmem:[#allocation5 + $0x20] sm:$0xff]
    %v69 = vld [vmem:[#allocation5 + $0x28] sm:$0xff]
    %v70 = vld [vmem:[#allocation5 + $0x30] sm:$0xff]
    %v71 = vld [vmem:[#allocation5 + $0x38] sm:$0xff]
    %v72 = vld [vmem:[#allocation5 + $0x40] sm:$0xff]
    %v73 = vld [vmem:[#allocation5 + $0x48] sm:$0xff]
    %v74 = vld [vmem:[#allocation5 + $0x50] sm:$0xff]
    %v75 = vld [vmem:[#allocation5 + $0x58] sm:$0xff]
    %v76 = vld [vmem:[#allocation5 + $0x60] sm:$0xff]
    %v77 = vld [vmem:[#allocation5 + $0x68] sm:$0xff]
    %v78 = vld [vmem:[#allocation5 + $0x70] sm:$0xff]
    %v79 = vld [vmem:[#allocation5 + $0x78] sm:$0xff]
    %v80 = vld [vmem:[%s2] sm:$0x1]
    %v82 = vlaneseq
    %v83 = vshrl.u32 %v82, 7
    %v84 = vsub.s32 0, %v83
    %v85 = vrot.slane %v80, %v84
    %87 = vmatprep.subr.mxu0 0.0
    %88 = vmatpush1.msra.mxu0 %v79
    %89 = vmatprep.subr.mxu0 0.0
    %90 = vmatpush1.msra.mxu0 %v78
    %91 = vmatprep.subr.mxu0 0.0
    %92 = vmatpush1.msra.mxu0 %v77
    %93 = vmatprep.subr.mxu0 0.0
    %94 = vmatpush1.msra.mxu0 %v76
    %95 = vmatprep.subr.mxu0 0.0
    %96 = vmatpush1.msra.mxu0 %v75
    %97 = vmatprep.subr.mxu0 0.0
    %98 = vmatpush1.msra.mxu0 %v74
    %99 = vmatprep.subr.mxu0 0.0
    %100 = vmatpush1.msra.mxu0 %v73
    %101 = vmatprep.subr.mxu0 0.0
    %102 = vmatpush1.msra.mxu0 %v72
    %103 = vmatprep.subr.mxu0 0.0
    %104 = vmatpush1.msra.mxu0 %v71
    %105 = vmatprep.subr.mxu0 0.0
    %106 = vmatpush1.msra.mxu0 %v70
    %107 = vmatprep.subr.mxu0 0.0
    %108 = vmatpush1.msra.mxu0 %v69
    %109 = vmatprep.subr.mxu0 0.0
    %110 = vmatpush1.msra.mxu0 %v68
    %111 = vmatprep.subr.mxu0 0.0
    %112 = vmatpush1.msra.mxu0 %v67
    %113 = vmatprep.subr.mxu0 0.0
    %114 = vmatpush1.msra.mxu0 %v66
    %115 = vmatprep.subr.mxu0 0.0
    %116 = vmatpush1.msra.mxu0 %v65
    %117 = vmatprep.subr.mxu0 0.0
    %118 = vmatpush1.msra.mxu0 %v64
    %119 = vmatprep.subr.mxu0 0.0
    %120 = vmatpush2.msra.mxu0 0.0
    %121 = vmatprep.subr.mxu0 0.0
    %122 = vmatpush2.msra.mxu0 0.0
    %123 = vmatprep.subr.mxu0 0.0
    %124 = vmatpush2.msra.mxu0 0.0
    %125 = vmatprep.subr.mxu0 0.0
    %126 = vmatpush2.msra.mxu0 0.0
    %127 = vmatprep.subr.mxu0 0.0
    %128 = vmatpush2.msra.mxu0 0.0
    %129 = vmatprep.subr.mxu0 0.0
    %130 = vmatpush2.msra.mxu0 0.0
    %131 = vmatprep.subr.mxu0 0.0
    %132 = vmatpush2.msra.mxu0 0.0
    %133 = vmatprep.subr.mxu0 0.0
    %134 = vmatpush2.msra.mxu0 0.0
    %135 = vmatprep.subr.mxu0 0.0
    %136 = vmatpush2.msra.mxu0 0.0
    %137 = vmatprep.subr.mxu0 0.0
    %138 = vmatpush2.msra.mxu0 0.0
    %139 = vmatprep.subr.mxu0 0.0
    %140 = vmatpush2.msra.mxu0 0.0
    %141 = vmatprep.subr.mxu0 0.0
    %142 = vmatpush2.msra.mxu0 0.0
    %143 = vmatprep.subr.mxu0 0.0
    %144 = vmatpush2.msra.mxu0 0.0
    %145 = vmatprep.subr.mxu0 0.0
    %146 = vmatpush2.msra.mxu0 0.0
    %147 = vmatprep.subr.mxu0 0.0
    %148 = vmatpush2.msra.mxu0 0.0
    %149 = vmatprep.subr.mxu0 0.0
    %150 = vmatpush2.msra.mxu0 0.0
    %151 = vmatprep.mubr.f32.mxu0 0.0
    %152 = vmatmul.mubr.f32.gmra.mxu0 %v62
    %v153 = vpop.f32.mrf.mxu0
    %v154 = vadd.f32 %v85, %v153
    %v155 = vpop.f32.mrf.mxu0
    %156 = vmatprep.mubr.f32.mxu0 0.0
    %157 = vmatmul.mubr.f32.gmra.mxu0 %v63
    %v158 = vpop.f32.mrf.mxu0
    %v159 = vadd.f32 %v85, %v158
    %v160 = vpop.f32.mrf.mxu0
    %161 = vdwg.mxu0
    %v162 = vmax.f32 %v154, 0.0
    %v163 = vmax.f32 %v159, 0.0
    %v164 = vld [vmem:[#allocation7] sm:$0xff]
    %v165 = vld [vmem:[#allocation7 + $0x8] sm:$0xff]
    %v166 = vld [vmem:[#allocation7 + $0x10] sm:$0xff]
    %v167 = vld [vmem:[#allocation7 + $0x18] sm:$0xff]
    %v168 = vld [vmem:[#allocation7 + $0x20] sm:$0xff]
    %v169 = vld [vmem:[#allocation7 + $0x28] sm:$0xff]
    %v170 = vld [vmem:[#allocation7 + $0x30] sm:$0xff]
    %v171 = vld [vmem:[#allocation7 + $0x38] sm:$0xff]
    %v172 = vld [vmem:[#allocation7 + $0x40] sm:$0xff]
    %v173 = vld [vmem:[#allocation7 + $0x48] sm:$0xff]
    %v174 = vld [vmem:[#allocation7 + $0x50] sm:$0xff]
    %v175 = vld [vmem:[#allocation7 + $0x58] sm:$0xff]
    %v176 = vld [vmem:[#allocation7 + $0x60] sm:$0xff]
    %v177 = vld [vmem:[#allocation7 + $0x68] sm:$0xff]
    %v178 = vld [vmem:[#allocation7 + $0x70] sm:$0xff]
    %v179 = vld [vmem:[#allocation7 + $0x78] sm:$0xff]
    %v180 = vld [vmem:[%s4] sm:$0x1]
    %v182 = vlaneseq
    %v183 = vshrl.u32 %v182, 7
    %v184 = vsub.s32 0, %v183
    %v185 = vrot.slane %v180, %v184
    %187 = vmatprep.subr.mxu0 0.0
    %188 = vmatpush1.msra.mxu0 %v179
    %189 = vmatprep.subr.mxu0 0.0
    %190 = vmatpush1.msra.mxu0 %v178
    %191 = vmatprep.subr.mxu0 0.0
    %192 = vmatpush1.msra.mxu0 %v177
    %193 = vmatprep.subr.mxu0 0.0
    %194 = vmatpush1.msra.mxu0 %v176
    %195 = vmatprep.subr.mxu0 0.0
    %196 = vmatpush1.msra.mxu0 %v175
    %197 = vmatprep.subr.mxu0 0.0
    %198 = vmatpush1.msra.mxu0 %v174
    %199 = vmatprep.subr.mxu0 0.0
    %200 = vmatpush1.msra.mxu0 %v173
    %201 = vmatprep.subr.mxu0 0.0
    %202 = vmatpush1.msra.mxu0 %v172
    %203 = vmatprep.subr.mxu0 0.0
    %204 = vmatpush1.msra.mxu0 %v171
    %205 = vmatprep.subr.mxu0 0.0
    %206 = vmatpush1.msra.mxu0 %v170
    %207 = vmatprep.subr.mxu0 0.0
    %208 = vmatpush1.msra.mxu0 %v169
    %209 = vmatprep.subr.mxu0 0.0
    %210 = vmatpush1.msra.mxu0 %v168
    %211 = vmatprep.subr.mxu0 0.0
    %212 = vmatpush1.msra.mxu0 %v167
    %213 = vmatprep.subr.mxu0 0.0
    %214 = vmatpush1.msra.mxu0 %v166
    %215 = vmatprep.subr.mxu0 0.0
    %216 = vmatpush1.msra.mxu0 %v165
    %217 = vmatprep.subr.mxu0 0.0
    %218 = vmatpush1.msra.mxu0 %v164
    %219 = vmatprep.subr.mxu0 0.0
    %220 = vmatpush2.msra.mxu0 0.0
    %221 = vmatprep.subr.mxu0 0.0
    %222 = vmatpush2.msra.mxu0 0.0
    %223 = vmatprep.subr.mxu0 0.0
    %224 = vmatpush2.msra.mxu0 0.0
    %225 = vmatprep.subr.mxu0 0.0
    %226 = vmatpush2.msra.mxu0 0.0
    %227 = vmatprep.subr.mxu0 0.0
    %228 = vmatpush2.msra.mxu0 0.0
    %229 = vmatprep.subr.mxu0 0.0
    %230 = vmatpush2.msra.mxu0 0.0
    %231 = vmatprep.subr.mxu0 0.0
    %232 = vmatpush2.msra.mxu0 0.0
    %233 = vmatprep.subr.mxu0 0.0
    %234 = vmatpush2.msra.mxu0 0.0
    %235 = vmatprep.subr.mxu0 0.0
    %236 = vmatpush2.msra.mxu0 0.0
    %237 = vmatprep.subr.mxu0 0.0
    %238 = vmatpush2.msra.mxu0 0.0
    %239 = vmatprep.subr.mxu0 0.0
    %240 = vmatpush2.msra.mxu0 0.0
    %241 = vmatprep.subr.mxu0 0.0
    %242 = vmatpush2.msra.mxu0 0.0
    %243 = vmatprep.subr.mxu0 0.0
    %244 = vmatpush2.msra.mxu0 0.0
    %245 = vmatprep.subr.mxu0 0.0
    %246 = vmatpush2.msra.mxu0 0.0
    %247 = vmatprep.subr.mxu0 0.0
    %248 = vmatpush2.msra.mxu0 0.0
    %249 = vmatprep.subr.mxu0 0.0
    %250 = vmatpush2.msra.mxu0 0.0
    %251 = vmatprep.mubr.f32.mxu0 0.0
    %252 = vmatmul.mubr.f32.gmra.mxu0 %v162
    %v253 = vpop.f32.mrf.mxu0
    %v254 = vadd.f32 %v185, %v253
    %v255 = vpop.f32.mrf.mxu0
    %256 = vmatprep.mubr.f32.mxu0 0.0
    %257 = vmatmul.mubr.f32.gmra.mxu0 %v163
    %v258 = vpop.f32.mrf.mxu0
    %v259 = vadd.f32 %v185, %v258
    %v260 = vpop.f32.mrf.mxu0
    %261 = vdwg.mxu0
    %262 = vst [vmem:[#allocation8] sm:$0xff] %v254
    %263 = vst [vmem:[#allocation8 + $0x8] sm:$0xff] %v259
    // Predicated region
    $region34: #{tpu_custom_call.1} parent=1 // pred_check
      _
    $region35: #{tpu_custom_call.1} parent=1 // pred_check_branch
      %265 = sbr.rel (0) target = $region37
    $region36: #{tpu_custom_call.1} parent=1 // pred_region
      %s267 = ssub.s32 256, 256
      %268 = vsyncadd [#allocation4], %s267
      %s269 = sshll.u32 [#allocation8], 4
      %s270 = int_to_ptr.vmem [resolvable:$true] %s269
      %275 = dma.vmem_to_hbm [thread:$0]  %s270, 256, %s5, [#allocation4], 128, 128, 8
    $region37: #{tpu_custom_call.1} parent=1 // pred_fallthru
      _
    // Predicated region
    $region38: #{tpu_custom_call.1} parent=1 // pred_check
      _
    $region39: #{tpu_custom_call.1} parent=1 // pred_check_branch
      %277 = sbr.rel (0) target = $region41
    $region40: #{tpu_custom_call.1} parent=1 // pred_region
      %278 = dma.done [#allocation4], 256
    $region41: #{tpu_custom_call.1} parent=1 // pred_fallthru
      _
    %279 = vsyncpa [#allocation3], 1
    %280 = vsyncpa [#allocation6], 1
    %281 = vsyncpa [#allocation4], 1

</llo_original>
